<compile_context>
chip_gen: v7x
topology: tpu7x:2x2x1
jax: 0.10.0
libtpu: 0.0.40
codegen_flags: <defaults>
</compile_context>

<pallas_src>
import math
import functools

import jax
import jax.numpy as jnp
from jax.experimental import pallas as pl
from jax.experimental.pallas import tpu as pltpu


def make_positional_encoding(context_size: int, d_model: int) -> jnp.ndarray:
    """Builds the (context_size, d_model) sin/cos table exactly like the torch code."""
    position = jnp.arange(context_size, dtype=jnp.float32)[:, None]          # (S, 1)
    denominator = jnp.exp(
        jnp.arange(0, d_model, 2, dtype=jnp.float32) * (-math.log(10000.0) / d_model)
    )                                                                         # (D/2,)
    angles = position * denominator                                           # (S, D/2)
    pe = jnp.zeros((context_size, d_model), dtype=jnp.float32)
    pe = pe.at[:, 0::2].set(jnp.sin(angles))
    pe = pe.at[:, 1::2].set(jnp.cos(angles))
    return pe


# ---------------------------------------------------------------------------
# Kernels: x block (TR, TC), pe block (1, TC) broadcast over rows.
# ---------------------------------------------------------------------------

def _pe_add_kernel(x_ref, pe_ref, o_ref):
    o_ref[...] = (x_ref[...] + pe_ref[...]).astype(o_ref.dtype)


def _pe_add_dropout_kernel(x_ref, pe_ref, bits_ref, o_ref, *, threshold, scale):
    y = x_ref[...] + pe_ref[...]
    # Inverted dropout via a single unsigned threshold compare:
    # drop iff bits < round(p * 2^32)  =>  keep prob = 1 - p.
    keep = bits_ref[...] >= jnp.uint32(threshold)
    y = jnp.where(keep, y * jnp.asarray(scale, dtype=y.dtype), jnp.zeros_like(y))
    o_ref[...] = y.astype(o_ref.dtype)


# ---------------------------------------------------------------------------
# Tile selection: target ~1 MiB blocks (measured sweet spot for streaming
# kernels; with double buffering of x/out/bits this stays well under the
# default scoped VMEM on v5e/v6e/v7x).  Last dim tile is a multiple of 128
# (lane-dense stores) or the full extent; row tile is a multiple of 8 or the
# full extent, per the (8, 128) BlockSpec rule.
# ---------------------------------------------------------------------------

_TARGET_BLOCK_BYTES = 1 << 20  # 1 MiB per block


def _choose_tiles(n_rows: int, n_cols: int, elem_bytes: int):
    max_elems = max(128, _TARGET_BLOCK_BYTES // elem_bytes)

    if n_cols <= max_elems:
        tc = n_cols                                  # full extent (always legal)
    else:
        tc = max(128, (max_elems // 128) * 128)      # lane-dense multiple of 128

    max_rows = max(1, max_elems // tc)
    if n_rows <= max_rows:
        tr = n_rows                                  # full extent (always legal)
    else:
        tr = max(8, (max_rows // 8) * 8)             # multiple of 8
        if tr > max_rows:
            # Had to round up to the minimum legal sublane tile; shrink the
            # column tile so the block stays near the byte budget.
            tc = max(128, min(tc, ((max_elems // tr) // 128) * 128))
    return tr, tc


# ---------------------------------------------------------------------------
# Wrapper
# ---------------------------------------------------------------------------

def positional_encoding_forward(
    x: jnp.ndarray,
    pe_table: jnp.ndarray,
    *,
    dropout_p: float = 0.1,
    training: bool = False,
    rng_key=None,
) -> jnp.ndarray:
    """x: (B, S, D).  pe_table: (context_size, D) with context_size >= S."""
    B, S, D = x.shape
    assert pe_table.shape[0] >= S and pe_table.shape[1] == D

    cols = S * D
    # Flatten to 2D so the output last dim is lane-dense (>=128 wide whenever
    # S*D >= 128) instead of a masked 32-wide store when D < 128.
    x2 = x.reshape(B, cols)
    pe2 = pe_table[:S, :].astype(x.dtype).reshape(1, cols)   # cast once, in wrapper

    elem_bytes = jnp.dtype(x.dtype).itemsize
    tr, tc = _choose_tiles(B, cols, elem_bytes)
    grid = (pl.cdiv(cols, tc), pl.cdiv(B, tr))   # cols outer, rows inner -> PE reuse

    x_spec = pl.BlockSpec((tr, tc), lambda c, r: (r, c))
    pe_spec = pl.BlockSpec((1, tc), lambda c, r: (0, c))
    out_spec = pl.BlockSpec((tr, tc), lambda c, r: (r, c))

    use_dropout = bool(training) and float(dropout_p) > 0.0
    if use_dropout:
        if rng_key is None:
            rng_key = jax.random.PRNGKey(0)
        # Randomness generated on the host-side JAX path (portable: works on
        # TPU and in interpret mode), consumed as a streamed uint32 operand.
        bits = jax.random.bits(rng_key, (B, cols), dtype=jnp.uint32)
        threshold = min(int(round(float(dropout_p) * float(2**32))), 2**32 - 1)
        scale = 1.0 / (1.0 - float(dropout_p))
        kernel = functools.partial(
            _pe_add_dropout_kernel, threshold=threshold, scale=scale
        )
        bits_spec = pl.BlockSpec((tr, tc), lambda c, r: (r, c))
        in_specs = [x_spec, pe_spec, bits_spec]
        operands = (x2, pe2, bits)
        extra_bytes = int(bits.size) * 4
    else:
        kernel = _pe_add_kernel
        in_specs = [x_spec, pe_spec]
        operands = (x2, pe2)
        extra_bytes = 0

    bytes_accessed = (
        2 * int(x2.size) * elem_bytes          # read x + write out
        + int(pe2.size) * elem_bytes           # read PE once
        + extra_bytes                          # dropout bits (training only)
    )

    out2 = pl.pallas_call(
        kernel,
        out_shape=jax.ShapeDtypeStruct((B, cols), x.dtype),
        grid=grid,
        in_specs=in_specs,
        out_specs=out_spec,
        compiler_params=pltpu.CompilerParams(
            # Purely elementwise: every grid step independent -> let v7x shard
            # across both TensorCores (neutral on single-TC chips).
            dimension_semantics=("parallel", "parallel"),
        ),
        cost_estimate=pl.CostEstimate(
            flops=int(x2.size),
            transcendentals=0,
            bytes_accessed=bytes_accessed,
        ),
    )(*operands)

    return out2.reshape(B, S, D)


# ---------------------------------------------------------------------------
# Smoke test
# ---------------------------------------------------------------------------

if __name__ == "__main__":
    context_size = 8
    d_model = 32
    batch = 2

    key = jax.random.PRNGKey(0)
    kx, kdrop = jax.random.split(key)
    x = jax.random.normal(kx, (batch, context_size, d_model), dtype=jnp.float32)

    pe_table = make_positional_encoding(context_size, d_model)

    # Eval-mode forward (dropout is identity) -- deterministic, check vs. reference.
    out_eval = positional_encoding_forward(x, pe_table, dropout_p=0.1, training=False)
    out_eval = jax.block_until_ready(out_eval)
    ref = x + pe_table[None, :context_size, :]
    assert out_eval.shape == (batch, context_size, d_model)
    assert jnp.allclose(out_eval, ref, atol=1e-6), "mismatch vs. reference"

    # Training-mode forward (inverted dropout, p=0.1).
    out_train = positional_encoding_forward(
        x, pe_table, dropout_p=0.1, training=True, rng_key=kdrop
    )
    out_train = jax.block_until_ready(out_train)
    assert out_train.shape == x.shape
    # Kept elements must equal ref / (1 - p); dropped elements are exactly 0.
    kept = out_train != 0.0
    assert jnp.allclose(
        jnp.where(kept, out_train, 0.0),
        jnp.where(kept, ref / (1.0 - 0.1), 0.0),
        atol=1e-5,
    ), "dropout scaling mismatch"

    print("KERNEL_OK")
</pallas_src>

<mosaic_0001>
module attributes {stable_mosaic.version = 11 : i64} {
  func.func @_pe_add_kernel(%arg0: i32, %arg1: i32, %arg2: memref<2x256xf32, #tpu.memory_space<vmem>>, %arg3: memref<1x256xf32, #tpu.memory_space<vmem>>, %arg4: memref<2x256xf32, #tpu.memory_space<vmem>>) attributes {dimension_semantics = [#tpu.dimension_semantics<parallel>, #tpu.dimension_semantics<parallel>], iteration_bounds = array<i64: 1, 1>, scalar_prefetch = 0 : i64, scratch_operands = 0 : i64, tpu.core_type = #tpu.core_type<tc>, window_params = [{transform_indices = @transform_0, window_bounds = array<i64: 2, 256>}, {transform_indices = @transform_1, window_bounds = array<i64: 1, 256>}, {transform_indices = @transform_2, window_bounds = array<i64: 2, 256>}]} {
    %c0 = arith.constant 0 : index
    %c0_0 = arith.constant 0 : index
    %0 = vector.load %arg2[%c0, %c0_0] : memref<2x256xf32, #tpu.memory_space<vmem>>, vector<2x256xf32>
    %c0_1 = arith.constant 0 : index
    %c0_2 = arith.constant 0 : index
    %1 = vector.load %arg3[%c0_1, %c0_2] : memref<1x256xf32, #tpu.memory_space<vmem>>, vector<1x256xf32>
    %2 = vector.broadcast %1 : vector<1x256xf32> to vector<2x256xf32>
    %3 = arith.addf %0, %2 : vector<2x256xf32>
    %c0_3 = arith.constant 0 : index
    %c0_4 = arith.constant 0 : index
    %4 = vector.load %arg4[%c0_3, %c0_4] : memref<2x256xf32, #tpu.memory_space<vmem>>, vector<2x256xf32>
    tpu.vector_store %arg4[%c0_3, %c0_4], %3 {strides = array<i32>} : memref<2x256xf32, #tpu.memory_space<vmem>>, vector<2x256xf32>,
    return
  }
  func.func @transform_0(%arg0: i32, %arg1: i32) -> (i32, i32) {
    %c0_i32 = arith.constant 0 : i32
    return %arg1, %arg0 : i32, i32
  }
  func.func @transform_1(%arg0: i32, %arg1: i32) -> (i32, i32) {
    %c0_i32 = arith.constant 0 : i32
    %c0_i32_0 = arith.constant 0 : i32
    return %c0_i32, %arg0 : i32, i32
  }
  func.func @transform_2(%arg0: i32, %arg1: i32) -> (i32, i32) {
    %c0_i32 = arith.constant 0 : i32
    return %arg1, %arg0 : i32, i32
  }
}

</mosaic_0001>

<llo_original>
// kernel: tpu_custom_call.1
$region0: #{tpu_custom_call.1}
  #allocation0 [shape = 'u32[]', space=smem, size = 0x4, offset = 0x4, fixed_abs, tag = 'smem constant byte address 0x4 - core index']
  #allocation1 [shape = 'u32[144,128]{1,0:T(1,128)}', space=vmem, size = 0x12000, scoped, tag = 'internal scratch']
  %s0 = inlined_call_operand.hbm [shape: f32[2,256], index: 0, kind: input, shape index: {}]
  %s1 = inlined_call_operand.vmem [shape: f32[1,256], index: 1, kind: input, shape index: {}]
  %s2 = inlined_call_operand.hbm [shape: f32[2,256], index: 2, kind: output, shape index: {}]
  %s3 = sld [smem:[#allocation0]]
  $region22: #{tpu_custom_call.1} parent=0
    _
  %s5 = ssub.s32 1, %s3
  %s6 = scalar_select 0, %s5, %s3
  $region1: #{tpu_custom_call.1} parent=0
    #allocation2 [shape = 'u8[2048]{0}', space=vmem, size = 0x800, scoped, tag = 'input window, operand 0, single buffered']
    #allocation3 [shape = 's32[1]{0}', space=sflag, size = 0x4, scoped, tag = 'scoped memory for tpu_custom_call.1']
    #allocation4 [shape = 's32[1]{0}', space=sflag, size = 0x4, scoped, tag = 'scoped memory for tpu_custom_call.1']
    #allocation5 [shape = 'u8[2048]{0}', space=vmem, size = 0x800, scoped, tag = 'output window, operand 0, single buffered']
    %7 = vsyncpa [#allocation3], 0
    %8 = vsyncpa [#allocation4], 0
    // Predicated region
    $region2: #{tpu_custom_call.1} parent=1 // pred_check
      _
    $region3: #{tpu_custom_call.1} parent=1 // pred_check_branch
      %10 = sbr.rel (0) target = $region5
    $region4: #{tpu_custom_call.1} parent=1 // pred_region
      %s12 = ssub.s32 64, 64
      %13 = vsyncadd [#allocation3], %s12
      %s15 = sshll.u32 [#allocation2], 4
      %s16 = int_to_ptr.vmem [resolvable:$true] %s15
      %18 = dma.hbm_to_vmem [thread:$0]  %s0, 64, %s16, [#allocation3]
    $region5: #{tpu_custom_call.1} parent=1 // pred_fallthru
      _
    // Predicated region
    $region6: #{tpu_custom_call.1} parent=1 // pred_check
      _
    $region7: #{tpu_custom_call.1} parent=1 // pred_check_branch
      %20 = sbr.rel (0) target = $region9
    $region8: #{tpu_custom_call.1} parent=1 // pred_region
      _
    $region9: #{tpu_custom_call.1} parent=1 // pred_fallthru
      _
    // Predicated region
    $region10: #{tpu_custom_call.1} parent=1 // pred_check
      _
    $region11: #{tpu_custom_call.1} parent=1 // pred_check_branch
      %22 = sbr.rel (0) target = $region13
    $region12: #{tpu_custom_call.1} parent=1 // pred_region
      %23 = dma.done [#allocation3], 64
    $region13: #{tpu_custom_call.1} parent=1 // pred_fallthru
      _
    %v24 = vld [vmem:[#allocation2] sm:$0xf]
    %v25 = vld [vmem:[%s1] sm:$0x3]
    %v27 = vlaneseq
    %v28 = vshrl.u32 %v27, 7
    %v29 = vsub.s32 0, %v28
    %v30 = vrot.slane %v25, %v29
    %v31 = vlaneseq
    %v32 = vshrl.u32 %v31, 7
    %v33 = vsub.s32 1, %v32
    %v34 = vrot.slane %v25, %v33
    %v35 = vcombine.low %v30, %v34
    %v37 = vunpack.c.l.s4 1983009808
    %v38 = vunpack.c.0.s8 %v37
    %v39 = vlaneseq
    %v40 = vshrl.u32 %v39, 7
    %v41 = vsub.s32 %v38, %v40
    %v42 = vrot.slane %v35, %v41
    %v44 = vadd.f32 %v24, %v42
    %45 = vst [vmem:[#allocation5] sm:$0xf] %v44
    // Predicated region
    $region14: #{tpu_custom_call.1} parent=1 // pred_check
      _
    $region15: #{tpu_custom_call.1} parent=1 // pred_check_branch
      %47 = sbr.rel (0) target = $region17
    $region16: #{tpu_custom_call.1} parent=1 // pred_region
      %s49 = ssub.s32 64, 64
      %50 = vsyncadd [#allocation4], %s49
      %s52 = sshll.u32 [#allocation5], 4
      %s53 = int_to_ptr.vmem [resolvable:$true] %s52
      %55 = dma.vmem_to_hbm [thread:$0]  %s53, 64, %s2, [#allocation4]
    $region17: #{tpu_custom_call.1} parent=1 // pred_fallthru
      _
    // Predicated region
    $region18: #{tpu_custom_call.1} parent=1 // pred_check
      _
    $region19: #{tpu_custom_call.1} parent=1 // pred_check_branch
      %57 = sbr.rel (0) target = $region21
    $region20: #{tpu_custom_call.1} parent=1 // pred_region
      %58 = dma.done [#allocation4], 64
    $region21: #{tpu_custom_call.1} parent=1 // pred_fallthru
      _
    %59 = vsyncpa [#allocation3], 1
    %60 = vsyncpa [#allocation4], 1

</llo_original>
